<compile_context>
chip_gen: v7x
topology: tpu7x:2x2x1
jax: 0.10.0
libtpu: 0.0.40
codegen_flags: <defaults>
</compile_context>

<pallas_src>
import functools
import numpy as np
import jax
import jax.numpy as jnp
from jax.experimental import pallas as pl
from jax.experimental.pallas import tpu as pltpu

BN_EPS = 1e-5

# Row layout of the packed (9, Hp) per-layer vector bundle.
_BPRE, _GPRE, _BETAPRE, _B1, _G1, _BETA1, _B2, _G2, _BETA2 = range(9)


def _round_up(x, m):
    return ((x + m - 1) // m) * m


def _elu(x):
    # ELU(alpha=1): x if x > 0 else exp(x) - 1 (clamp so untaken branch can't overflow)
    return jnp.where(x > 0, x, jnp.exp(jnp.minimum(x, 0.0)) - 1.0)


def _bn_fold(x, gamma, beta):
    """Training-mode BatchNorm1d folded into one scale/shift (biased var, eps=1e-5)."""
    mean = jnp.mean(x, axis=0, keepdims=True)
    var = jnp.mean((x - mean) ** 2, axis=0, keepdims=True)
    scale = gamma * jax.lax.rsqrt(var + BN_EPS)
    return x * scale + (beta - mean * scale)


def stat_net_kernel(h_ref, wpre_ref, w1_ref, w2_ref, wp_ref, vecs_ref, bp_ref,
                    out_ref, *scratch,
                    B, S, TB, nbt, cache_z, apply_bn_pre, apply_bn_post, mm_dtype):
    # Grid is (npass, nbt) with the batch-tile axis t innermost (row-major order).
    t = pl.program_id(1)
    Hp = wpre_ref.shape[1]
    rows = TB * S

    def prepool_z():
        # (TB*S, D) @ (D, Hp) -> f32.  Linear bias is omitted whenever BN follows
        # (exactly cancelled by BN's mean subtraction); added in the no-BN branch.
        return jnp.dot(h_ref[...], wpre_ref[...], preferred_element_type=jnp.float32)

    def postpool(e2):
        vecs = vecs_ref[...]

        def layer(x, w_ref, b_row, g_row, beta_row):
            z = jnp.dot(x.astype(mm_dtype), w_ref[...],
                        preferred_element_type=jnp.float32)
            if apply_bn_post:
                z = _bn_fold(z, vecs[g_row:g_row + 1, :], vecs[beta_row:beta_row + 1, :])
            else:
                z = z + vecs[b_row:b_row + 1, :]
            return _elu(z)

        e2 = layer(e2, w1_ref, _B1, _G1, _BETA1)
        e2 = layer(e2, w2_ref, _B2, _G2, _BETA2)
        # Single lane-dense (B, Cp) output slab; split into (mu, logvar) in the wrapper.
        out_ref[...] = (jnp.dot(e2.astype(mm_dtype), wp_ref[...],
                                preferred_element_type=jnp.float32) + bp_ref[...])

    if cache_z:
        # ---- fast path: stream h once, cache z in resident VMEM, epilogue on last tile
        (z_ref,) = scratch
        row0 = pl.multiple_of(t * rows, rows)   # rows is a multiple of 8 (or nbt == 1)
        z_ref[pl.ds(row0, rows), :] = prepool_z()

        @pl.when(t == nbt - 1)
        def _epilogue():
            zf = z_ref[...]                      # (B*S, Hp) f32, VMEM resident
            vecs = vecs_ref[...]
            if apply_bn_pre:
                # Two-pass (centered) batch statistics, as in the reference / PyTorch.
                mean = jnp.mean(zf, axis=0, keepdims=True)
                var = jnp.mean((zf - mean) ** 2, axis=0, keepdims=True)
                scale = vecs[_GPRE:_GPRE + 1, :] * jax.lax.rsqrt(var + BN_EPS)
                e = zf * scale + (vecs[_BETAPRE:_BETAPRE + 1, :] - mean * scale)
            else:
                e = zf + vecs[_BPRE:_BPRE + 1, :]
            e = _elu(e)
            # Sample mean.  Reshape is repack-free when S % 8 == 0.
            pooled = jnp.mean(e.reshape(B, S, Hp), axis=1)       # (B, Hp) f32
            postpool(pooled)
    else:
        # ---- fallback: z does not fit in VMEM; two-pass streaming statistics and
        # GEMM recompute (pass 0 = stats, pass 1 = compute; t is innermost so pass 0
        # finishes over all tiles before pass 1 starts).
        # TODO(synk): spill z to an HBM scratch instead of re-streaming h / re-GEMM.
        ssum_ref, ssq_ref, pooled_ref = scratch
        p = pl.program_id(0)

        def stats_body():
            @pl.when(t == 0)
            def _():
                ssum_ref[...] = jnp.zeros_like(ssum_ref)
                ssq_ref[...] = jnp.zeros_like(ssq_ref)

            z = prepool_z()
            ssum_ref[...] += jnp.sum(z, axis=0, keepdims=True)
            ssq_ref[...] += jnp.sum(z * z, axis=0, keepdims=True)

        def compute_body():
            vecs = vecs_ref[...]
            if apply_bn_pre:
                @pl.when(t == 0)
                def _finalize_stats():
                    inv_n = 1.0 / float(B * S)
                    mean = ssum_ref[...] * inv_n
                    # E[z^2]-E[z]^2; clamp guards against cancellation going negative.
                    var = jnp.maximum(ssq_ref[...] * inv_n - mean * mean, 0.0)
                    scale = vecs[_GPRE:_GPRE + 1, :] * jax.lax.rsqrt(var + BN_EPS)
                    ssum_ref[...] = scale                                    # BN scale
                    ssq_ref[...] = vecs[_BETAPRE:_BETAPRE + 1, :] - mean * scale  # shift

            z = prepool_z()
            if apply_bn_pre:
                e = z * ssum_ref[...] + ssq_ref[...]
            else:
                e = z + vecs[_BPRE:_BPRE + 1, :]
            e = _elu(e)

            pooled = jnp.mean(e.reshape(TB, S, Hp), axis=1)      # (TB, Hp)
            r0 = pl.multiple_of(t * TB, TB)
            pooled_ref[pl.ds(r0, TB), :] = pooled

            @pl.when(t == nbt - 1)
            def _post():
                postpool(pooled_ref[...])

        if apply_bn_pre:
            pl.when(p == 0)(stats_body)
            pl.when(p == 1)(compute_body)
        else:
            compute_body()


def _vmem_capacity_bytes():
    try:
        info = pltpu.get_tpu_info()
        cap = int(getattr(info, "vmem_capacity_bytes", 0) or 0)
        if cap > 0:
            return cap
    except Exception:
        pass
    return 64 * (2 ** 20)   # conservative default (v7x per-core VMEM)


def _plan_schedule(B, S, D, Hp, Cp, mm_itemsize, usable_bytes,
                   max_batch_tile=None, force_no_cache=False):
    """Pick (cache_z, TB): cache the PrePool pre-activation in VMEM when it fits."""
    weight_bytes = (D * Hp + 2 * Hp * Hp + Hp * Cp) * mm_itemsize
    small_bytes = (9 * Hp + Cp + B * Cp) * 4
    resident = 2 * (weight_bytes + small_bytes)          # conservative: x2 double-buffer
    z_bytes = B * S * Hp * 4
    cap_tb = B if max_batch_tile is None else max(1, min(B, max_batch_tile))
    divisors = [d for d in range(cap_tb, 0, -1) if B % d == 0]

    if not force_no_cache:
        for tb in divisors:
            if tb != B and (tb * S) % 8 != 0:
                continue                                 # keep z stores sublane-aligned
            if resident + z_bytes + 2 * tb * S * D * mm_itemsize <= usable_bytes:
                return True, tb

    pooled_bytes = (B + 2) * Hp * 4
    for tb in divisors:
        if resident + pooled_bytes + 2 * tb * S * D * mm_itemsize <= usable_bytes:
            return False, tb
    return False, divisors[-1]


def conv_statistic_network(h, params, c_dim, *, matmul_dtype=jnp.bfloat16,
                           max_batch_tile=None, force_no_cache=False):
    """h: (batch, sample, input_dim). Returns (mu, logvar), each (batch, c_dim) f32."""
    B, S, D = h.shape
    H = params["wpre"].shape[1]
    Hp = _round_up(H, 128)
    C2 = 2 * c_dim
    Cp = _round_up(C2, 128)
    mm_dtype = jnp.dtype(matmul_dtype)
    mm_itemsize = mm_dtype.itemsize

    def pad2(a, r, c):
        return jnp.pad(a, ((0, r - a.shape[0]), (0, c - a.shape[1])))

    # Lane-dense, zero-padded operands (padding is exactly neutral; see header).
    h2 = h.reshape(B * S, D).astype(mm_dtype)            # wrapper-side reshape (free)
    wpre = pad2(params["wpre"].astype(mm_dtype), D, Hp)
    w1 = pad2(params["w1"].astype(mm_dtype), Hp, Hp)
    w2 = pad2(params["w2"].astype(mm_dtype), Hp, Hp)
    wp = pad2(params["wp"].astype(mm_dtype), Hp, Cp)
    bp = pad2(params["bp"].astype(jnp.float32), 1, Cp)
    # Nine H-length per-layer vectors packed into one (9, Hp) f32 input (one DMA).
    vecs = pad2(jnp.concatenate(
        [params["bpre"], params["gpre"], params["betapre"],
         params["b1"], params["g1"], params["beta1"],
         params["b2"], params["g2"], params["beta2"]], axis=0).astype(jnp.float32),
        9, Hp)

    apply_bn_pre = (B * S) != 1     # matches `if e.size(0) != 1` in PrePool
    apply_bn_post = B != 1          # matches `if e.size(0) != 1` in PostPool

    cap = _vmem_capacity_bytes()
    usable = cap // 2
    cache_z, TB = _plan_schedule(B, S, D, Hp, Cp, mm_itemsize, usable,
                                 max_batch_tile=max_batch_tile,
                                 force_no_cache=force_no_cache)
    nbt = B // TB
    npass = 1 if (cache_z or not apply_bn_pre) else 2
    # Two-pass streaming stats require apply_bn_pre and t innermost in the grid.
    assert (npass == 2) == ((not cache_z) and apply_bn_pre)

    if cache_z:
        scratch_shapes = [pltpu.VMEM((B * S, Hp), jnp.float32)]   # resident z
        scratch_bytes = B * S * Hp * 4
    else:
        scratch_shapes = [pltpu.VMEM((1, Hp), jnp.float32),       # col-sum -> BN scale
                          pltpu.VMEM((1, Hp), jnp.float32),       # col-sumsq -> BN shift
                          pltpu.VMEM((B, Hp), jnp.float32)]       # pooled sample means
        scratch_bytes = (2 * Hp + B * Hp) * 4

    kernel = functools.partial(
        stat_net_kernel, B=B, S=S, TB=TB, nbt=nbt, cache_z=cache_z,
        apply_bn_pre=apply_bn_pre, apply_bn_post=apply_bn_post, mm_dtype=mm_dtype)

    # VMEM limit + cost estimate hints.
    weight_bytes = (D * Hp + 2 * Hp * Hp + Hp * Cp) * mm_itemsize
    small_bytes = (9 * Hp + Cp) * 4 + B * Cp * 4
    est_bytes = 2 * (weight_bytes + small_bytes) + scratch_bytes \
        + 2 * TB * S * D * mm_itemsize
    vmem_limit = int(min(max(est_bytes + (16 << 20), 32 << 20), int(cap * 0.95)))

    passes = 2 if npass == 2 else 1
    flops = 2 * B * S * D * Hp * passes + 2 * B * (2 * Hp * Hp + Hp * Cp)
    transcendentals = B * S * Hp + 2 * B * Hp
    bytes_accessed = B * S * D * mm_itemsize * passes + weight_bytes + small_bytes \
        + B * Cp * 4
    cost = pl.CostEstimate(flops=int(flops), transcendentals=int(transcendentals),
                           bytes_accessed=int(bytes_accessed))

    out = pl.pallas_call(
        kernel,
        out_shape=jax.ShapeDtypeStruct((B, Cp), jnp.float32),
        grid_spec=pltpu.PrefetchScalarGridSpec(
            num_scalar_prefetch=0,
            grid=(npass, nbt),                 # t (batch tile) is innermost
            in_specs=[
                pl.BlockSpec((TB * S, D), lambda p, t: (t, 0)),    # h rows, batch-tiled
                pl.BlockSpec((D, Hp), lambda p, t: (0, 0)),        # wpre (resident)
                pl.BlockSpec((Hp, Hp), lambda p, t: (0, 0)),       # w1
                pl.BlockSpec((Hp, Hp), lambda p, t: (0, 0)),       # w2
                pl.BlockSpec((Hp, Cp), lambda p, t: (0, 0)),       # wp
                pl.BlockSpec((9, Hp), lambda p, t: (0, 0)),        # packed vectors
                pl.BlockSpec((1, Cp), lambda p, t: (0, 0)),        # bp
            ],
            out_specs=pl.BlockSpec((B, Cp), lambda p, t: (0, 0)),
            scratch_shapes=scratch_shapes),
        compiler_params=pltpu.CompilerParams(
            dimension_semantics=("arbitrary", "arbitrary"),
            vmem_limit_bytes=vmem_limit),
        cost_estimate=cost,
    )(h2, wpre, w1, w2, wp, vecs, bp)

    return out[:, :c_dim], out[:, c_dim:2 * c_dim]


# --------------------------------------------------------------------- params / reference

def _linear_init(key, fan_in, fan_out):
    # matches nn.Linear default: U(-1/sqrt(fan_in), 1/sqrt(fan_in)) for W and b
    kw, kb = jax.random.split(key)
    bound = 1.0 / np.sqrt(fan_in)
    W = jax.random.uniform(kw, (fan_in, fan_out), jnp.float32, -bound, bound)
    b = jax.random.uniform(kb, (1, fan_out), jnp.float32, -bound, bound)
    return W, b


def make_params(key, input_dim, hidden_dim, c_dim):
    k = jax.random.split(key, 4)
    wpre, bpre = _linear_init(k[0], input_dim, hidden_dim)
    w1, b1 = _linear_init(k[1], hidden_dim, hidden_dim)
    w2, b2 = _linear_init(k[2], hidden_dim, hidden_dim)
    wp, bp = _linear_init(k[3], hidden_dim, 2 * c_dim)
    ones = jnp.ones((1, hidden_dim), jnp.float32)
    zeros = jnp.zeros((1, hidden_dim), jnp.float32)
    return dict(wpre=wpre, bpre=bpre, gpre=ones, betapre=zeros,
                w1=w1, b1=b1, g1=ones, beta1=zeros,
                w2=w2, b2=b2, g2=ones, beta2=zeros,
                wp=wp, bp=bp)


def _bn_train_ref(x, gamma, beta):
    mean = jnp.mean(x, axis=0, keepdims=True)
    var = jnp.mean((x - mean) ** 2, axis=0, keepdims=True)
    return (x - mean) * jax.lax.rsqrt(var + BN_EPS) * gamma + beta


def reference_forward(h, params, c_dim, matmul_dtype=jnp.float32):
    """Pure-JAX reference mirroring the PyTorch forward (training-mode BN).
    Matmul operands are cast to `matmul_dtype` (f32 accumulation); BN/ELU in f32."""
    md = jnp.dtype(matmul_dtype)

    def mm(a, b):
        return jnp.dot(a.astype(md), b.astype(md), preferred_element_type=jnp.float32)

    B, S, D = h.shape
    e = mm(h.reshape(B * S, D), params["wpre"]) + params["bpre"]
    if e.shape[0] != 1:
        e = _bn_train_ref(e, params["gpre"], params["betapre"])
    e = _elu(e)
    e = e.reshape(B, S, -1).mean(axis=1)
    for w, b, g, bt in ((params["w1"], params["b1"], params["g1"], params["beta1"]),
                        (params["w2"], params["b2"], params["g2"], params["beta2"])):
        e = mm(e, w) + b
        if e.shape[0] != 1:
            e = _bn_train_ref(e, g, bt)
        e = _elu(e)
    out = mm(e, params["wp"]) + params["bp"]
    return out[:, :c_dim], out[:, c_dim:]


if __name__ == "__main__":
    def run_case(name, batch, sample, input_dim, hidden_dim, c_dim,
                 matmul_dtype, tol, **plan_kw):
        key = jax.random.PRNGKey(0)
        kh, kp = jax.random.split(key)
        h = jax.random.normal(kh, (batch, sample, input_dim), jnp.float32)
        params = make_params(kp, input_dim, hidden_dim, c_dim)
        mu, logvar = conv_statistic_network(h, params, c_dim,
                                            matmul_dtype=matmul_dtype, **plan_kw)
        mu = jax.block_until_ready(mu)
        logvar = jax.block_until_ready(logvar)
        mu_ref, logvar_ref = reference_forward(h, params, c_dim,
                                               matmul_dtype=matmul_dtype)
        np.testing.assert_allclose(np.asarray(mu), np.asarray(mu_ref),
                                   rtol=tol, atol=tol, err_msg=name)
        np.testing.assert_allclose(np.asarray(logvar), np.asarray(logvar_ref),
                                   rtol=tol, atol=tol, err_msg=name)

    # f32, cached-z single-pass path (single batch tile)
    run_case("f32_cached", 2, 8, 64, 32, 16, jnp.float32, 1e-4)
    # bf16 fast path (compared against a bf16-matmul reference; BN/ELU stay f32)
    run_case("bf16_cached", 2, 8, 64, 32, 16, jnp.bfloat16, 2e-3)
    # cached-z path with multiple batch tiles (dynamic, aligned z-scratch stores)
    run_case("f32_cached_tiled", 4, 8, 64, 32, 16, jnp.float32, 1e-4, max_batch_tile=2)
    # fallback two-pass streaming-statistics path (z not cached)
    run_case("f32_two_pass", 4, 8, 64, 32, 16, jnp.float32, 1e-4, force_no_cache=True)

    print("KERNEL_OK")
</pallas_src>

<mosaic_0001>
module attributes {stable_mosaic.version = 11 : i64} {
  func.func @stat_net_kernel(%arg0: i32, %arg1: i32, %arg2: memref<16x64xf32, #tpu.memory_space<vmem>>, %arg3: memref<64x128xf32, #tpu.memory_space<vmem>>, %arg4: memref<128x128xf32, #tpu.memory_space<vmem>>, %arg5: memref<128x128xf32, #tpu.memory_space<vmem>>, %arg6: memref<128x128xf32, #tpu.memory_space<vmem>>, %arg7: memref<9x128xf32, #tpu.memory_space<vmem>>, %arg8: memref<1x128xf32, #tpu.memory_space<vmem>>, %arg9: memref<2x128xf32, #tpu.memory_space<vmem>>, %arg10: memref<16x128xf32, #tpu.memory_space<vmem>>) attributes {dimension_semantics = [#tpu.dimension_semantics<arbitrary>, #tpu.dimension_semantics<arbitrary>], iteration_bounds = array<i64: 1, 1>, scalar_prefetch = 0 : i64, scratch_operands = 1 : i64, tpu.core_type = #tpu.core_type<tc>, window_params = [{transform_indices = @transform_0, window_bounds = array<i64: 16, 64>}, {pipeline_mode = #tpu.pipeline_mode<synchronous>, transform_indices = @transform_1, window_bounds = array<i64: 64, 128>}, {pipeline_mode = #tpu.pipeline_mode<synchronous>, transform_indices = @transform_2, window_bounds = array<i64: 128, 128>}, {pipeline_mode = #tpu.pipeline_mode<synchronous>, transform_indices = @transform_3, window_bounds = array<i64: 128, 128>}, {pipeline_mode = #tpu.pipeline_mode<synchronous>, transform_indices = @transform_4, window_bounds = array<i64: 128, 128>}, {pipeline_mode = #tpu.pipeline_mode<synchronous>, transform_indices = @transform_5, window_bounds = array<i64: 9, 128>}, {pipeline_mode = #tpu.pipeline_mode<synchronous>, transform_indices = @transform_6, window_bounds = array<i64: 1, 128>}, {pipeline_mode = #tpu.pipeline_mode<synchronous>, transform_indices = @transform_7, window_bounds = array<i64: 2, 128>}]} {
    %c16_i32 = arith.constant 16 : i32
    %0 = arith.muli %arg1, %c16_i32 : i32
    %1 = tpu.assume_multiple %0, 16 : i32
    %c0 = arith.constant 0 : index
    %c0_0 = arith.constant 0 : index
    %2 = vector.load %arg2[%c0, %c0_0] : memref<16x64xf32, #tpu.memory_space<vmem>>, vector<16x64xf32>
    %c0_1 = arith.constant 0 : index
    %c0_2 = arith.constant 0 : index
    %3 = vector.load %arg3[%c0_1, %c0_2] : memref<64x128xf32, #tpu.memory_space<vmem>>, vector<64x128xf32>
    %cst = arith.constant dense<0.000000e+00> : vector<16x128xf32>
    %4 = tpu.matmul %2, %3, %cst {dimension_numbers = #tpu.dot_dimension_numbers<[1], [0], [0], [1], [0, 0, 1, 1], [], []>} : vector<16x64xf32>, vector<64x128xf32>, vector<16x128xf32> -> vector<16x128xf32>
    %5 = arith.index_cast %1 : i32 to index
    %c0_3 = arith.constant 0 : index
    %6 = vector.load %arg10[%5, %c0_3] : memref<16x128xf32, #tpu.memory_space<vmem>>, vector<16x128xf32>
    tpu.vector_store %arg10[%5, %c0_3], %4 {strides = array<i32>} : memref<16x128xf32, #tpu.memory_space<vmem>>, vector<16x128xf32>,
    %c0_i32 = arith.constant 0 : i32
    %7 = arith.cmpi eq, %arg1, %c0_i32 : i32
    %8 = arith.extui %7 : i1 to i32
    %c0_i32_4 = arith.constant 0 : i32
    %9 = arith.cmpi ne, %8, %c0_i32_4 : i32
    scf.if %9 {
      %c0_5 = arith.constant 0 : index
      %c0_6 = arith.constant 0 : index
      %10 = vector.load %arg10[%c0_5, %c0_6] : memref<16x128xf32, #tpu.memory_space<vmem>>, vector<16x128xf32>
      %c0_7 = arith.constant 0 : index
      %c0_8 = arith.constant 0 : index
      %11 = vector.load %arg7[%c0_7, %c0_8] : memref<9x128xf32, #tpu.memory_space<vmem>>, vector<9x128xf32>
      %cst_9 = arith.constant dense<0.000000e+00> : vector<128xf32>
      %12 = vector.multi_reduction <add>, %10, %cst_9 [0] : vector<16x128xf32> to vector<128xf32>
      %13 = vector.shape_cast %12 : vector<128xf32> to vector<1x128xf32>
      %cst_10 = arith.constant 1.600000e+01 : f32
      %14 = vector.broadcast %cst_10 : f32 to vector<1x128xf32>
      %15 = arith.divf %13, %14 : vector<1x128xf32>
      %16 = vector.broadcast %15 : vector<1x128xf32> to vector<16x128xf32>
      %17 = arith.subf %10, %16 : vector<16x128xf32>
      %18 = arith.mulf %17, %17 : vector<16x128xf32>
      %cst_11 = arith.constant dense<0.000000e+00> : vector<128xf32>
      %19 = vector.multi_reduction <add>, %18, %cst_11 [0] : vector<16x128xf32> to vector<128xf32>
      %20 = vector.shape_cast %19 : vector<128xf32> to vector<1x128xf32>
      %cst_12 = arith.constant 1.600000e+01 : f32
      %21 = vector.broadcast %cst_12 : f32 to vector<1x128xf32>
      %22 = arith.divf %20, %21 : vector<1x128xf32>
      %23 = vector.extract_strided_slice %11 {offsets = [1, 0], sizes = [1, 128], strides = [1, 1]} : vector<9x128xf32> to vector<1x128xf32>
      %cst_13 = arith.constant 9.99999974E-6 : f32
      %24 = vector.broadcast %cst_13 : f32 to vector<1x128xf32>
      %25 = arith.addf %22, %24 : vector<1x128xf32>
      %26 = math.rsqrt %25 : vector<1x128xf32>
      %27 = arith.mulf %23, %26 : vector<1x128xf32>
      %28 = vector.broadcast %27 : vector<1x128xf32> to vector<16x128xf32>
      %29 = arith.mulf %10, %28 : vector<16x128xf32>
      %30 = vector.extract_strided_slice %11 {offsets = [2, 0], sizes = [1, 128], strides = [1, 1]} : vector<9x128xf32> to vector<1x128xf32>
      %31 = arith.mulf %15, %27 : vector<1x128xf32>
      %32 = arith.subf %30, %31 : vector<1x128xf32>
      %33 = vector.broadcast %32 : vector<1x128xf32> to vector<16x128xf32>
      %34 = arith.addf %29, %33 : vector<16x128xf32>
      %cst_14 = arith.constant 0.000000e+00 : f32
      %35 = vector.broadcast %cst_14 : f32 to vector<16x128xf32>
      %36 = arith.cmpf ogt, %34, %35 : vector<16x128xf32>
      %cst_15 = arith.constant 0.000000e+00 : f32
      %37 = vector.broadcast %cst_15 : f32 to vector<16x128xf32>
      %38 = arith.minimumf %34, %37 : vector<16x128xf32>
      %39 = math.exp %38 : vector<16x128xf32>
      %cst_16 = arith.constant 1.000000e+00 : f32
      %40 = vector.broadcast %cst_16 : f32 to vector<16x128xf32>
      %41 = arith.subf %39, %40 : vector<16x128xf32>
      %42 = arith.select %36, %34, %41 : vector<16x128xi1>, vector<16x128xf32>
      %43 = vector.shape_cast %42 : vector<16x128xf32> to vector<2x8x128xf32>
      %cst_17 = arith.constant dense<0.000000e+00> : vector<2x128xf32>
      %44 = vector.multi_reduction <add>, %43, %cst_17 [1] : vector<2x8x128xf32> to vector<2x128xf32>
      %cst_18 = arith.constant 8.000000e+00 : f32
      %45 = vector.broadcast %cst_18 : f32 to vector<2x128xf32>
      %46 = arith.divf %44, %45 : vector<2x128xf32>
      %c0_19 = arith.constant 0 : index
      %c0_20 = arith.constant 0 : index
      %47 = vector.load %arg7[%c0_19, %c0_20] : memref<9x128xf32, #tpu.memory_space<vmem>>, vector<9x128xf32>
      %c0_21 = arith.constant 0 : index
      %c0_22 = arith.constant 0 : index
      %48 = vector.load %arg4[%c0_21, %c0_22] : memref<128x128xf32, #tpu.memory_space<vmem>>, vector<128x128xf32>
      %cst_23 = arith.constant dense<0.000000e+00> : vector<2x128xf32>
      %49 = tpu.matmul %46, %48, %cst_23 {dimension_numbers = #tpu.dot_dimension_numbers<[1], [0], [0], [1], [0, 0, 1, 1], [], []>} : vector<2x128xf32>, vector<128x128xf32>, vector<2x128xf32> -> vector<2x128xf32>
      %50 = vector.extract_strided_slice %47 {offsets = [4, 0], sizes = [1, 128], strides = [1, 1]} : vector<9x128xf32> to vector<1x128xf32>
      %51 = vector.extract_strided_slice %47 {offsets = [5, 0], sizes = [1, 128], strides = [1, 1]} : vector<9x128xf32> to vector<1x128xf32>
      %cst_24 = arith.constant dense<0.000000e+00> : vector<128xf32>
      %52 = vector.multi_reduction <add>, %49, %cst_24 [0] : vector<2x128xf32> to vector<128xf32>
      %53 = vector.shape_cast %52 : vector<128xf32> to vector<1x128xf32>
      %cst_25 = arith.constant 2.000000e+00 : f32
      %54 = vector.broadcast %cst_25 : f32 to vector<1x128xf32>
      %55 = arith.divf %53, %54 : vector<1x128xf32>
      %56 = vector.broadcast %55 : vector<1x128xf32> to vector<2x128xf32>
      %57 = arith.subf %49, %56 : vector<2x128xf32>
      %58 = arith.mulf %57, %57 : vector<2x128xf32>
      %cst_26 = arith.constant dense<0.000000e+00> : vector<128xf32>
      %59 = vector.multi_reduction <add>, %58, %cst_26 [0] : vector<2x128xf32> to vector<128xf32>
      %60 = vector.shape_cast %59 : vector<128xf32> to vector<1x128xf32>
      %cst_27 = arith.constant 2.000000e+00 : f32
      %61 = vector.broadcast %cst_27 : f32 to vector<1x128xf32>
      %62 = arith.divf %60, %61 : vector<1x128xf32>
      %cst_28 = arith.constant 9.99999974E-6 : f32
      %63 = vector.broadcast %cst_28 : f32 to vector<1x128xf32>
      %64 = arith.addf %62, %63 : vector<1x128xf32>
      %65 = math.rsqrt %64 : vector<1x128xf32>
      %66 = arith.mulf %50, %65 : vector<1x128xf32>
      %67 = vector.broadcast %66 : vector<1x128xf32> to vector<2x128xf32>
      %68 = arith.mulf %49, %67 : vector<2x128xf32>
      %69 = arith.mulf %55, %66 : vector<1x128xf32>
      %70 = arith.subf %51, %69 : vector<1x128xf32>
      %71 = vector.broadcast %70 : vector<1x128xf32> to vector<2x128xf32>
      %72 = arith.addf %68, %71 : vector<2x128xf32>
      %cst_29 = arith.constant 0.000000e+00 : f32
      %73 = vector.broadcast %cst_29 : f32 to vector<2x128xf32>
      %74 = arith.cmpf ogt, %72, %73 : vector<2x128xf32>
      %cst_30 = arith.constant 0.000000e+00 : f32
      %75 = vector.broadcast %cst_30 : f32 to vector<2x128xf32>
      %76 = arith.minimumf %72, %75 : vector<2x128xf32>
      %77 = math.exp %76 : vector<2x128xf32>
      %cst_31 = arith.constant 1.000000e+00 : f32
      %78 = vector.broadcast %cst_31 : f32 to vector<2x128xf32>
      %79 = arith.subf %77, %78 : vector<2x128xf32>
      %80 = arith.select %74, %72, %79 : vector<2x128xi1>, vector<2x128xf32>
      %c0_32 = arith.constant 0 : index
      %c0_33 = arith.constant 0 : index
      %81 = vector.load %arg5[%c0_32, %c0_33] : memref<128x128xf32, #tpu.memory_space<vmem>>, vector<128x128xf32>
      %cst_34 = arith.constant dense<0.000000e+00> : vector<2x128xf32>
      %82 = tpu.matmul %80, %81, %cst_34 {dimension_numbers = #tpu.dot_dimension_numbers<[1], [0], [0], [1], [0, 0, 1, 1], [], []>} : vector<2x128xf32>, vector<128x128xf32>, vector<2x128xf32> -> vector<2x128xf32>
      %83 = vector.extract_strided_slice %47 {offsets = [7, 0], sizes = [1, 128], strides = [1, 1]} : vector<9x128xf32> to vector<1x128xf32>
      %84 = vector.extract_strided_slice %47 {offsets = [8, 0], sizes = [1, 128], strides = [1, 1]} : vector<9x128xf32> to vector<1x128xf32>
      %cst_35 = arith.constant dense<0.000000e+00> : vector<128xf32>
      %85 = vector.multi_reduction <add>, %82, %cst_35 [0] : vector<2x128xf32> to vector<128xf32>
      %86 = vector.shape_cast %85 : vector<128xf32> to vector<1x128xf32>
      %cst_36 = arith.constant 2.000000e+00 : f32
      %87 = vector.broadcast %cst_36 : f32 to vector<1x128xf32>
      %88 = arith.divf %86, %87 : vector<1x128xf32>
      %89 = vector.broadcast %88 : vector<1x128xf32> to vector<2x128xf32>
      %90 = arith.subf %82, %89 : vector<2x128xf32>
      %91 = arith.mulf %90, %90 : vector<2x128xf32>
      %cst_37 = arith.constant dense<0.000000e+00> : vector<128xf32>
      %92 = vector.multi_reduction <add>, %91, %cst_37 [0] : vector<2x128xf32> to vector<128xf32>
      %93 = vector.shape_cast %92 : vector<128xf32> to vector<1x128xf32>
      %cst_38 = arith.constant 2.000000e+00 : f32
      %94 = vector.broadcast %cst_38 : f32 to vector<1x128xf32>
      %95 = arith.divf %93, %94 : vector<1x128xf32>
      %cst_39 = arith.constant 9.99999974E-6 : f32
      %96 = vector.broadcast %cst_39 : f32 to vector<1x128xf32>
      %97 = arith.addf %95, %96 : vector<1x128xf32>
      %98 = math.rsqrt %97 : vector<1x128xf32>
      %99 = arith.mulf %83, %98 : vector<1x128xf32>
      %100 = vector.broadcast %99 : vector<1x128xf32> to vector<2x128xf32>
      %101 = arith.mulf %82, %100 : vector<2x128xf32>
      %102 = arith.mulf %88, %99 : vector<1x128xf32>
      %103 = arith.subf %84, %102 : vector<1x128xf32>
      %104 = vector.broadcast %103 : vector<1x128xf32> to vector<2x128xf32>
      %105 = arith.addf %101, %104 : vector<2x128xf32>
      %cst_40 = arith.constant 0.000000e+00 : f32
      %106 = vector.broadcast %cst_40 : f32 to vector<2x128xf32>
      %107 = arith.cmpf ogt, %105, %106 : vector<2x128xf32>
      %cst_41 = arith.constant 0.000000e+00 : f32
      %108 = vector.broadcast %cst_41 : f32 to vector<2x128xf32>
      %109 = arith.minimumf %105, %108 : vector<2x128xf32>
      %110 = math.exp %109 : vector<2x128xf32>
      %cst_42 = arith.constant 1.000000e+00 : f32
      %111 = vector.broadcast %cst_42 : f32 to vector<2x128xf32>
      %112 = arith.subf %110, %111 : vector<2x128xf32>
      %113 = arith.select %107, %105, %112 : vector<2x128xi1>, vector<2x128xf32>
      %c0_43 = arith.constant 0 : index
      %c0_44 = arith.constant 0 : index
      %114 = vector.load %arg6[%c0_43, %c0_44] : memref<128x128xf32, #tpu.memory_space<vmem>>, vector<128x128xf32>
      %cst_45 = arith.constant dense<0.000000e+00> : vector<2x128xf32>
      %115 = tpu.matmul %113, %114, %cst_45 {dimension_numbers = #tpu.dot_dimension_numbers<[1], [0], [0], [1], [0, 0, 1, 1], [], []>} : vector<2x128xf32>, vector<128x128xf32>, vector<2x128xf32> -> vector<2x128xf32>
      %c0_46 = arith.constant 0 : index
      %c0_47 = arith.constant 0 : index
      %116 = vector.load %arg8[%c0_46, %c0_47] : memref<1x128xf32, #tpu.memory_space<vmem>>, vector<1x128xf32>
      %117 = vector.broadcast %116 : vector<1x128xf32> to vector<2x128xf32>
      %118 = arith.addf %115, %117 : vector<2x128xf32>
      %c0_48 = arith.constant 0 : index
      %c0_49 = arith.constant 0 : index
      %119 = vector.load %arg9[%c0_48, %c0_49] : memref<2x128xf32, #tpu.memory_space<vmem>>, vector<2x128xf32>
      tpu.vector_store %arg9[%c0_48, %c0_49], %118 {strides = array<i32>} : memref<2x128xf32, #tpu.memory_space<vmem>>, vector<2x128xf32>,
    } else {
    }
    return
  }
  func.func @transform_0(%arg0: i32, %arg1: i32) -> (i32, i32) {
    %c0_i32 = arith.constant 0 : i32
    %c0_i32_0 = arith.constant 0 : i32
    return %arg1, %c0_i32 : i32, i32
  }
  func.func @transform_1(%arg0: i32, %arg1: i32) -> (i32, i32) {
    %c0_i32 = arith.constant 0 : i32
    %c0_i32_0 = arith.constant 0 : i32
    %c0_i32_1 = arith.constant 0 : i32
    return %c0_i32, %c0_i32_0 : i32, i32
  }
  func.func @transform_2(%arg0: i32, %arg1: i32) -> (i32, i32) {
    %c0_i32 = arith.constant 0 : i32
    %c0_i32_0 = arith.constant 0 : i32
    %c0_i32_1 = arith.constant 0 : i32
    return %c0_i32, %c0_i32_0 : i32, i32
  }
  func.func @transform_3(%arg0: i32, %arg1: i32) -> (i32, i32) {
    %c0_i32 = arith.constant 0 : i32
    %c0_i32_0 = arith.constant 0 : i32
    %c0_i32_1 = arith.constant 0 : i32
    return %c0_i32, %c0_i32_0 : i32, i32
  }
  func.func @transform_4(%arg0: i32, %arg1: i32) -> (i32, i32) {
    %c0_i32 = arith.constant 0 : i32
    %c0_i32_0 = arith.constant 0 : i32
    %c0_i32_1 = arith.constant 0 : i32
    return %c0_i32, %c0_i32_0 : i32, i32
  }
  func.func @transform_5(%arg0: i32, %arg1: i32) -> (i32, i32) {
    %c0_i32 = arith.constant 0 : i32
    %c0_i32_0 = arith.constant 0 : i32
    %c0_i32_1 = arith.constant 0 : i32
    return %c0_i32, %c0_i32_0 : i32, i32
  }
  func.func @transform_6(%arg0: i32, %arg1: i32) -> (i32, i32) {
    %c0_i32 = arith.constant 0 : i32
    %c0_i32_0 = arith.constant 0 : i32
    %c0_i32_1 = arith.constant 0 : i32
    return %c0_i32, %c0_i32_0 : i32, i32
  }
  func.func @transform_7(%arg0: i32, %arg1: i32) -> (i32, i32) {
    %c0_i32 = arith.constant 0 : i32
    %c0_i32_0 = arith.constant 0 : i32
    %c0_i32_1 = arith.constant 0 : i32
    return %c0_i32, %c0_i32_0 : i32, i32
  }
}

</mosaic_0001>

<llo_original>
// kernel: tpu_custom_call.1
$region0: #{tpu_custom_call.1}
  #allocation0 [shape = 'u32[]', space=smem, size = 0x4, offset = 0x4, fixed_abs, tag = 'smem constant byte address 0x4 - core index']
  #allocation1 [shape = 'u32[144,128]{1,0:T(1,128)}', space=vmem, size = 0x12000, scoped, tag = 'internal scratch']
  #allocation2 [shape = 'f32[16,128]{1,0:T(8,128)}', space=vmem, size = 0x2000, scoped, tag = 'scratch operand']
  %s0 = inlined_call_operand.hbm [shape: f32[16,64], index: 0, kind: input, shape index: {}]
  %s1 = inlined_call_operand.hbm [shape: f32[64,128], index: 1, kind: input, shape index: {}]
  %s2 = inlined_call_operand.hbm [shape: f32[128,128], index: 2, kind: input, shape index: {}]
  %s3 = inlined_call_operand.hbm [shape: f32[128,128], index: 3, kind: input, shape index: {}]
  %s4 = inlined_call_operand.hbm [shape: f32[128,128], index: 4, kind: input, shape index: {}]
  %s5 = inlined_call_operand.vmem [shape: f32[9,128], index: 5, kind: input, shape index: {}]
  %s6 = inlined_call_operand.vmem [shape: f32[1,128], index: 6, kind: input, shape index: {}]
  %s7 = inlined_call_operand.hbm [shape: f32[2,128], index: 7, kind: output, shape index: {}]
  %s8 = sld [smem:[#allocation0]]
  $region62: #{tpu_custom_call.1} parent=0
    _
  %s10 = ssub.s32 1, %s8
  %s11 = scalar_select 0, %s10, %s8
  $region1: #{tpu_custom_call.1} parent=0
    #allocation3 [shape = 'u8[8192]{0}', space=vmem, size = 0x2000, scoped, tag = 'input window, operand 0, single buffered']
    #allocation4 [shape = 's32[1]{0}', space=sflag, size = 0x4, scoped, tag = 'scoped memory for tpu_custom_call.1']
    #allocation5 [shape = 's32[1]{0}', space=sflag, size = 0x4, scoped, tag = 'scoped memory for tpu_custom_call.1']
    #allocation6 [shape = 'u8[32768]{0}', space=vmem, size = 0x8000, scoped, tag = 'input window, operand 1, single buffered']
    #allocation7 [shape = 's32[1]{0}', space=sflag, size = 0x4, scoped, tag = 'scoped memory for tpu_custom_call.1']
    #allocation8 [shape = 'u8[65536]{0}', space=vmem, size = 0x10000, scoped, tag = 'input window, operand 2, single buffered']
    #allocation9 [shape = 'u8[65536]{0}', space=vmem, size = 0x10000, scoped, tag = 'input window, operand 3, single buffered']
    #allocation10 [shape = 's32[1]{0}', space=sflag, size = 0x4, scoped, tag = 'scoped memory for tpu_custom_call.1']
    #allocation11 [shape = 'u8[65536]{0}', space=vmem, size = 0x10000, scoped, tag = 'input window, operand 4, single buffered']
    #allocation12 [shape = 'u8[1024]{0}', space=vmem, size = 0x400, scoped, tag = 'output window, operand 0, single buffered']
    %12 = vsyncpa [#allocation4], 0
    %13 = vsyncpa [#allocation7], 0
    %14 = vsyncpa [#allocation10], 0
    %15 = vsyncpa [#allocation5], 0
    // Predicated region
    $region2: #{tpu_custom_call.1} parent=1 // pred_check
      _
    $region3: #{tpu_custom_call.1} parent=1 // pred_check_branch
      %17 = sbr.rel (0) target = $region5
    $region4: #{tpu_custom_call.1} parent=1 // pred_region
      %s19 = ssub.s32 256, 256
      %20 = vsyncadd [#allocation4], %s19
      %s21 = sshll.u32 [#allocation3], 4
      %s22 = int_to_ptr.vmem [resolvable:$true] %s21
      %27 = dma.hbm_to_vmem [thread:$0]  %s0, 256, %s22, [#allocation4], 128, 128, 8
    $region5: #{tpu_custom_call.1} parent=1 // pred_fallthru
      _
    // Predicated region
    $region6: #{tpu_custom_call.1} parent=1 // pred_check
      _
    $region7: #{tpu_custom_call.1} parent=1 // pred_check_branch
      %29 = sbr.rel (0) target = $region9
    $region8: #{tpu_custom_call.1} parent=1 // pred_region
      %s31 = ssub.s32 1024, 1024
      %32 = vsyncadd [#allocation7], %s31
      %s33 = sshll.u32 [#allocation6], 4
      %s34 = int_to_ptr.vmem [resolvable:$true] %s33
      %39 = dma.hbm_to_vmem [thread:$0]  %s1, 1024, %s34, [#allocation7], 128, 128, 8
    $region9: #{tpu_custom_call.1} parent=1 // pred_fallthru
      _
    // Predicated region
    $region10: #{tpu_custom_call.1} parent=1 // pred_check
      _
    $region11: #{tpu_custom_call.1} parent=1 // pred_check_branch
      %41 = sbr.rel (0) target = $region13
    $region12: #{tpu_custom_call.1} parent=1 // pred_region
      %s43 = ssub.s32 2048, 2048
      %44 = vsyncadd [#allocation7], %s43
      %s45 = sshll.u32 [#allocation8], 4
      %s46 = int_to_ptr.vmem [resolvable:$true] %s45
      %51 = dma.hbm_to_vmem [thread:$0]  %s2, 2048, %s46, [#allocation7], 128, 128, 8
    $region13: #{tpu_custom_call.1} parent=1 // pred_fallthru
      _
    // Predicated region
    $region14: #{tpu_custom_call.1} parent=1 // pred_check
      _
    $region15: #{tpu_custom_call.1} parent=1 // pred_check_branch
      %53 = sbr.rel (0) target = $region17
    $region16: #{tpu_custom_call.1} parent=1 // pred_region
      %s55 = ssub.s32 2048, 2048
      %56 = vsyncadd [#allocation10], %s55
      %s57 = sshll.u32 [#allocation9], 4
      %s58 = int_to_ptr.vmem [resolvable:$true] %s57
      %63 = dma.hbm_to_vmem [thread:$0]  %s3, 2048, %s58, [#allocation10], 128, 128, 8
    $region17: #{tpu_custom_call.1} parent=1 // pred_fallthru
      _
    // Predicated region
    $region18: #{tpu_custom_call.1} parent=1 // pred_check
      _
    $region19: #{tpu_custom_call.1} parent=1 // pred_check_branch
      %65 = sbr.rel (0) target = $region21
    $region20: #{tpu_custom_call.1} parent=1 // pred_region
      %s67 = ssub.s32 2048, 2048
      %68 = vsyncadd [#allocation10], %s67
      %s69 = sshll.u32 [#allocation11], 4
      %s70 = int_to_ptr.vmem [resolvable:$true] %s69
      %75 = dma.hbm_to_vmem [thread:$0]  %s4, 2048, %s70, [#allocation10], 128, 128, 8
    $region21: #{tpu_custom_call.1} parent=1 // pred_fallthru
      _
    // Predicated region
    $region22: #{tpu_custom_call.1} parent=1 // pred_check
      _
    $region23: #{tpu_custom_call.1} parent=1 // pred_check_branch
      %77 = sbr.rel (0) target = $region25
    $region24: #{tpu_custom_call.1} parent=1 // pred_region
      _
    $region25: #{tpu_custom_call.1} parent=1 // pred_fallthru
      _
    // Predicated region
    $region26: #{tpu_custom_call.1} parent=1 // pred_check
      _
    $region27: #{tpu_custom_call.1} parent=1 // pred_check_branch
      %79 = sbr.rel (0) target = $region29
    $region28: #{tpu_custom_call.1} parent=1 // pred_region
      _
    $region29: #{tpu_custom_call.1} parent=1 // pred_fallthru
      _
    // Predicated region
    $region30: #{tpu_custom_call.1} parent=1 // pred_check
      _
    $region31: #{tpu_custom_call.1} parent=1 // pred_check_branch
      %81 = sbr.rel (0) target = $region33
    $region32: #{tpu_custom_call.1} parent=1 // pred_region
      %82 = dma.done [#allocation4], 256
    $region33: #{tpu_custom_call.1} parent=1 // pred_fallthru
      _
    // Predicated region
    $region34: #{tpu_custom_call.1} parent=1 // pred_check
      _
    $region35: #{tpu_custom_call.1} parent=1 // pred_check_branch
      %84 = sbr.rel (0) target = $region37
    $region36: #{tpu_custom_call.1} parent=1 // pred_region
      %85 = dma.done [#allocation7], 1024
    $region37: #{tpu_custom_call.1} parent=1 // pred_fallthru
      _
    // Predicated region
    $region38: #{tpu_custom_call.1} parent=1 // pred_check
      _
    $region39: #{tpu_custom_call.1} parent=1 // pred_check_branch
      %87 = sbr.rel (0) target = $region41
    $region40: #{tpu_custom_call.1} parent=1 // pred_region
      %88 = dma.done [#allocation7], 2048
    $region41: #{tpu_custom_call.1} parent=1 // pred_fallthru
      _
    // Predicated region
    $region42: #{tpu_custom_call.1} parent=1 // pred_check
      _
    $region43: #{tpu_custom_call.1} parent=1 // pred_check_branch
      %90 = sbr.rel (0) target = $region45
    $region44: #{tpu_custom_call.1} parent=1 // pred_region
      %91 = dma.done [#allocation10], 2048
    $region45: #{tpu_custom_call.1} parent=1 // pred_fallthru
      _
    // Predicated region
    $region46: #{tpu_custom_call.1} parent=1 // pred_check
      _
    $region47: #{tpu_custom_call.1} parent=1 // pred_check_branch
      %93 = sbr.rel (0) target = $region49
    $region48: #{tpu_custom_call.1} parent=1 // pred_region
      %94 = dma.done [#allocation10], 2048
    $region49: #{tpu_custom_call.1} parent=1 // pred_fallthru
      _
    %s95 = smul.u32 0, 16
    %v96 = vld [vmem:[#allocation3] sm:$0xff]
    %v97 = vld [vmem:[#allocation3 + $0x8] sm:$0xff]
    %v98 = vld [vmem:[#allocation6] sm:$0xff]
    %v99 = vld [vmem:[#allocation6 + $0x8] sm:$0xff]
    %v100 = vld [vmem:[#allocation6 + $0x10] sm:$0xff]
    %v101 = vld [vmem:[#allocation6 + $0x18] sm:$0xff]
    %v102 = vld [vmem:[#allocation6 + $0x20] sm:$0xff]
    %v103 = vld [vmem:[#allocation6 + $0x28] sm:$0xff]
    %v104 = vld [vmem:[#allocation6 + $0x30] sm:$0xff]
    %v105 = vld [vmem:[#allocation6 + $0x38] sm:$0xff]
    %vm106 = vcmask 523264
    %v108 = vsel %vm106, %v96, 0
    %v111 = vsel %vm106, %v97, 0
    %113 = vmatprep.subr.mxu0 0.0
    %114 = vmatpush1.msra.mxu0 %v98
    %115 = vmatprep.subr.mxu0 0.0
    %116 = vmatpush1.msra.mxu0 %v99
    %117 = vmatprep.subr.mxu0 0.0
    %118 = vmatpush1.msra.mxu0 %v100
    %119 = vmatprep.subr.mxu0 0.0
    %120 = vmatpush1.msra.mxu0 %v101
    %121 = vmatprep.subr.mxu0 0.0
    %122 = vmatpush1.msra.mxu0 %v102
    %123 = vmatprep.subr.mxu0 0.0
    %124 = vmatpush1.msra.mxu0 %v103
    %125 = vmatprep.subr.mxu0 0.0
    %126 = vmatpush1.msra.mxu0 %v104
    %127 = vmatprep.subr.mxu0 0.0
    %128 = vmatpush1.msra.mxu0 %v105
    %129 = vmatprep.subr.mxu0 0.0
    %130 = vmatpush1.msra.mxu0 0.0
    %131 = vmatprep.subr.mxu0 0.0
    %132 = vmatpush1.msra.mxu0 0.0
    %133 = vmatprep.subr.mxu0 0.0
    %134 = vmatpush1.msra.mxu0 0.0
    %135 = vmatprep.subr.mxu0 0.0
    %136 = vmatpush1.msra.mxu0 0.0
    %137 = vmatprep.subr.mxu0 0.0
    %138 = vmatpush1.msra.mxu0 0.0
    %139 = vmatprep.subr.mxu0 0.0
    %140 = vmatpush1.msra.mxu0 0.0
    %141 = vmatprep.subr.mxu0 0.0
    %142 = vmatpush1.msra.mxu0 0.0
    %143 = vmatprep.subr.mxu0 0.0
    %144 = vmatpush1.msra.mxu0 0.0
    %145 = vmatprep.subr.mxu0 0.0
    %146 = vmatpush1.msra.mxu0 0.0
    %147 = vmatprep.subr.mxu0 0.0
    %148 = vmatpush1.msra.mxu0 0.0
    %149 = vmatprep.subr.mxu0 0.0
    %150 = vmatpush1.msra.mxu0 0.0
    %151 = vmatprep.subr.mxu0 0.0
    %152 = vmatpush1.msra.mxu0 0.0
    %153 = vmatprep.subr.mxu0 0.0
    %154 = vmatpush1.msra.mxu0 0.0
    %155 = vmatprep.subr.mxu0 0.0
    %156 = vmatpush1.msra.mxu0 0.0
    %157 = vmatprep.subr.mxu0 0.0
    %158 = vmatpush1.msra.mxu0 0.0
    %159 = vmatprep.subr.mxu0 0.0
    %160 = vmatpush1.msra.mxu0 0.0
    %161 = vmatprep.subr.mxu0 0.0
    %162 = vmatpush1.msra.mxu0 0.0
    %163 = vmatprep.subr.mxu0 0.0
    %164 = vmatpush1.msra.mxu0 0.0
    %165 = vmatprep.subr.mxu0 0.0
    %166 = vmatpush1.msra.mxu0 0.0
    %167 = vmatprep.subr.mxu0 0.0
    %168 = vmatpush1.msra.mxu0 0.0
    %169 = vmatprep.subr.mxu0 0.0
    %170 = vmatpush1.msra.mxu0 0.0
    %171 = vmatprep.subr.mxu0 0.0
    %172 = vmatpush1.msra.mxu0 0.0
    %173 = vmatprep.subr.mxu0 0.0
    %174 = vmatpush1.msra.mxu0 0.0
    %175 = vmatprep.subr.mxu0 0.0
    %176 = vmatpush1.msra.mxu0 0.0
    %177 = vmatprep.mubr.f32.mxu0 0.0
    %178 = vmatmul.mubr.f32.gmra.mrb[0].mxu0 %v108
    %v179 = vpop.f32.mrb[0].mxu0
    %v180 = vadd.f32 0.0, %v179
    %v181 = vpop.f32.mrb[0].mxu0
    %182 = vmatprep.mubr.f32.mxu0 0.0
    %183 = vmatmul.mubr.f32.gmra.mrb[0].mxu0 %v111
    %v184 = vpop.f32.mrb[0].mxu0
    %v185 = vadd.f32 0.0, %v184
    %v186 = vpop.f32.mrb[0].mxu0
    %187 = vdwg.mxu0
    %s188 = scalar_lea.vmem [#allocation2], %s95
    %189 = vst [vmem:[%s188] sm:$0xff] %v180
    %190 = vst [vmem:[%s188 + $0x8] sm:$0xff] %v185
    %p191 = scmp.eq.s32.totalorder 0, 0
    // Predicated region
    $region50: #{tpu_custom_call.1} parent=1 // pred_check
      %p192 = pneg %p191
    $region51: #{tpu_custom_call.1} parent=1 // pred_check_branch
      %194 = sbr.rel (%p192) target = $region53
    $region52: #{tpu_custom_call.1} parent=1 // pred_region
      %v195 = vld [vmem:[#allocation2] sm:$0xff]
      %v196 = vld [vmem:[#allocation2 + $0x8] sm:$0xff]
      %v197 = vld [vmem:[%s5] sm:$0xff]
      %v198 = vld [vmem:[%s5 + $0x8] sm:$0x1]
      %v199 = vadd.f32 %v195, %v196
      %v200 = vrot.slane %v199, 4
      %v201 = vadd.f32 %v199, %v200
      %v202 = vrot.slane %v201, 2
      %v203 = vadd.f32 %v201, %v202
      %v204 = vrot.slane %v203, 1
      %v205 = vadd.f32 %v203, %v204
      %v206 = vrcp.pop 16.0
      %v207 = vmul.f32 %v205, %v206
      %v208 = vsub.f32 %v195, %v207
      %v209 = vsub.f32 %v196, %v207
      %v210 = vmul.f32 %v208, %v208
      %v211 = vmul.f32 %v209, %v209
      %v212 = vadd.f32 %v210, %v211
      %v213 = vrot.slane %v212, 4
      %v214 = vadd.f32 %v212, %v213
      %v215 = vrot.slane %v214, 2
      %v216 = vadd.f32 %v214, %v215
      %v217 = vrot.slane %v216, 1
      %v218 = vadd.f32 %v216, %v217
      %v219 = vmul.f32 %v218, %v206
      %v220 = vadd.f32 %v219, 1e-05
      %v221 = vrsqrt.pop %v220
      %v222 = vmul.f32 %v197, %v221
      %v223 = vlaneseq
      %v224 = vshrl.u32 %v223, 7
      %v225 = vsub.s32 1, %v224
      %v226 = vrot.slane %v222, %v225
      %v227 = vmul.f32 %v195, %v226
      %v228 = vmul.f32 %v196, %v226
      %v229 = vmul.f32 %v207, %v222
      %v231 = vrot.slane %v229, 7
      %v233 = vsub.f32 %v197, %v231
      %v234 = vlaneseq
      %v235 = vshrl.u32 %v234, 7
      %v236 = vsub.s32 2, %v235
      %v237 = vrot.slane %v233, %v236
      %v238 = vadd.f32 %v227, %v237
      %v239 = vadd.f32 %v228, %v237
      %vm240 = vcmp.gt.f32.partialorder %v238, 0.0
      %vm241 = vcmp.gt.f32.partialorder %v239, 0.0
      %v242 = vmin.f32 %v238, 0.0
      %v243 = vmin.f32 %v239, 0.0
      %v244 = vmul.f32 %v242, 1.442695
      %v245 = vpow.pop %v244
      %v246 = vmul.f32 %v243, 1.442695
      %v247 = vpow.pop %v246
      %v248 = vsub.f32 %v245, 1.0
      %v249 = vsub.f32 %v247, 1.0
      %v250 = vsel %vm240, %v238, %v248
      %v251 = vsel %vm241, %v239, %v249
      %v252 = vrot.slane %v250, 4
      %v253 = vadd.f32 %v250, %v252
      %v254 = vrot.slane %v253, 2
      %v255 = vadd.f32 %v253, %v254
      %v256 = vrot.slane %v255, 1
      %v257 = vadd.f32 %v255, %v256
      %v258 = vrot.slane %v251, 4
      %v259 = vadd.f32 %v251, %v258
      %v260 = vrot.slane %v259, 2
      %v261 = vadd.f32 %v259, %v260
      %v262 = vrot.slane %v261, 1
      %v263 = vadd.f32 %v261, %v262
      %v264 = vrcp.pop 8.0
      %v265 = vmul.f32 %v257, %v264
      %v266 = vmul.f32 %v263, %v264
      %v267 = vld [vmem:[#allocation8] sm:$0xff]
      %v268 = vld [vmem:[#allocation8 + $0x8] sm:$0xff]
      %v269 = vld [vmem:[#allocation8 + $0x10] sm:$0xff]
      %v270 = vld [vmem:[#allocation8 + $0x18] sm:$0xff]
      %v271 = vld [vmem:[#allocation8 + $0x20] sm:$0xff]
      %v272 = vld [vmem:[#allocation8 + $0x28] sm:$0xff]
      %v273 = vld [vmem:[#allocation8 + $0x30] sm:$0xff]
      %v274 = vld [vmem:[#allocation8 + $0x38] sm:$0xff]
      %v275 = vld [vmem:[#allocation8 + $0x40] sm:$0xff]
      %v276 = vld [vmem:[#allocation8 + $0x48] sm:$0xff]
      %v277 = vld [vmem:[#allocation8 + $0x50] sm:$0xff]
      %v278 = vld [vmem:[#allocation8 + $0x58] sm:$0xff]
      %v279 = vld [vmem:[#allocation8 + $0x60] sm:$0xff]
      %v280 = vld [vmem:[#allocation8 + $0x68] sm:$0xff]
      %v281 = vld [vmem:[#allocation8 + $0x70] sm:$0xff]
      %v282 = vld [vmem:[#allocation8 + $0x78] sm:$0xff]
      %vm285 = vcmask 1041409
      %v286 = vsel %vm285, %v266, %v265
      %288 = vmatprep.subr.mxu0 0.0
      %289 = vmatpush1.msra.mxu0 %v267
      %290 = vmatprep.subr.mxu0 0.0
      %291 = vmatpush1.msra.mxu0 %v268
      %292 = vmatprep.subr.mxu0 0.0
      %293 = vmatpush1.msra.mxu0 %v269
      %294 = vmatprep.subr.mxu0 0.0
      %295 = vmatpush1.msra.mxu0 %v270
      %296 = vmatprep.subr.mxu0 0.0
      %297 = vmatpush1.msra.mxu0 %v271
      %298 = vmatprep.subr.mxu0 0.0
      %299 = vmatpush1.msra.mxu0 %v272
      %300 = vmatprep.subr.mxu0 0.0
      %301 = vmatpush1.msra.mxu0 %v273
      %302 = vmatprep.subr.mxu0 0.0
      %303 = vmatpush1.msra.mxu0 %v274
      %304 = vmatprep.subr.mxu0 0.0
      %305 = vmatpush1.msra.mxu0 %v275
      %306 = vmatprep.subr.mxu0 0.0
      %307 = vmatpush1.msra.mxu0 %v276
      %308 = vmatprep.subr.mxu0 0.0
      %309 = vmatpush1.msra.mxu0 %v277
      %310 = vmatprep.subr.mxu0 0.0
      %311 = vmatpush1.msra.mxu0 %v278
      %312 = vmatprep.subr.mxu0 0.0
      %313 = vmatpush1.msra.mxu0 %v279
      %314 = vmatprep.subr.mxu0 0.0
      %315 = vmatpush1.msra.mxu0 %v280
      %316 = vmatprep.subr.mxu0 0.0
      %317 = vmatpush1.msra.mxu0 %v281
      %318 = vmatprep.subr.mxu0 0.0
      %319 = vmatpush1.msra.mxu0 %v282
      %320 = vmatprep.subr.mxu0 0.0
      %321 = vmatpush1.msra.mxu0 0.0
      %322 = vmatprep.subr.mxu0 0.0
      %323 = vmatpush1.msra.mxu0 0.0
      %324 = vmatprep.subr.mxu0 0.0
      %325 = vmatpush1.msra.mxu0 0.0
      %326 = vmatprep.subr.mxu0 0.0
      %327 = vmatpush1.msra.mxu0 0.0
      %328 = vmatprep.subr.mxu0 0.0
      %329 = vmatpush1.msra.mxu0 0.0
      %330 = vmatprep.subr.mxu0 0.0
      %331 = vmatpush1.msra.mxu0 0.0
      %332 = vmatprep.subr.mxu0 0.0
      %333 = vmatpush1.msra.mxu0 0.0
      %334 = vmatprep.subr.mxu0 0.0
      %335 = vmatpush1.msra.mxu0 0.0
      %336 = vmatprep.subr.mxu0 0.0
      %337 = vmatpush1.msra.mxu0 0.0
      %338 = vmatprep.subr.mxu0 0.0
      %339 = vmatpush1.msra.mxu0 0.0
      %340 = vmatprep.subr.mxu0 0.0
      %341 = vmatpush1.msra.mxu0 0.0
      %342 = vmatprep.subr.mxu0 0.0
      %343 = vmatpush1.msra.mxu0 0.0
      %344 = vmatprep.subr.mxu0 0.0
      %345 = vmatpush1.msra.mxu0 0.0
      %346 = vmatprep.subr.mxu0 0.0
      %347 = vmatpush1.msra.mxu0 0.0
      %348 = vmatprep.subr.mxu0 0.0
      %349 = vmatpush1.msra.mxu0 0.0
      %350 = vmatprep.subr.mxu0 0.0
      %351 = vmatpush1.msra.mxu0 0.0
      %352 = vmatprep.mubr.f32.mxu0 0.0
      %353 = vmatmul.mubr.f32.gmra.mrb[0].mxu0 %v286
      %v354 = vpop.f32.mrb[0].mxu0
      %v355 = vadd.f32 0.0, %v354
      %v356 = vpop.f32.mrb[0].mxu0
      %357 = vdwg.mxu0
      %vm358 = vcmask 1041408
      %v359 = vsel %vm358, %v355, 0.0
      %v360 = vrot.slane %v359, 4
      %v361 = vadd.f32 %v359, %v360
      %v362 = vrot.slane %v361, 2
      %v363 = vadd.f32 %v361, %v362
      %v364 = vrot.slane %v363, 1
      %v365 = vadd.f32 %v363, %v364
      %v366 = vrcp.pop 2.0
      %v367 = vmul.f32 %v365, %v366
      %v368 = vsub.f32 %v355, %v367
      %v369 = vmul.f32 %v368, %v368
      %v370 = vsel %vm358, %v369, 0.0
      %v371 = vrot.slane %v370, 4
      %v372 = vadd.f32 %v370, %v371
      %v373 = vrot.slane %v372, 2
      %v374 = vadd.f32 %v372, %v373
      %v375 = vrot.slane %v374, 1
      %v376 = vadd.f32 %v374, %v375
      %v377 = vmul.f32 %v376, %v366
      %v378 = vadd.f32 %v377, 1e-05
      %v379 = vrsqrt.pop %v378
      %v380 = vmul.f32 %v197, %v379
      %v381 = vlaneseq
      %v382 = vshrl.u32 %v381, 7
      %v383 = vsub.s32 4, %v382
      %v384 = vrot.slane %v380, %v383
      %v385 = vmul.f32 %v355, %v384
      %v386 = vmul.f32 %v367, %v380
      %v388 = vrot.slane %v386, 7
      %v390 = vsub.f32 %v197, %v388
      %v391 = vlaneseq
      %v392 = vshrl.u32 %v391, 7
      %v393 = vsub.s32 5, %v392
      %v394 = vrot.slane %v390, %v393
      %v395 = vadd.f32 %v385, %v394
      %vm396 = vcmp.gt.f32.partialorder %v395, 0.0
      %v397 = vmin.f32 %v395, 0.0
      %v398 = vmul.f32 %v397, 1.442695
      %v399 = vpow.pop %v398
      %v400 = vsub.f32 %v399, 1.0
      %v401 = vsel %vm396, %v395, %v400
      %v402 = vld [vmem:[#allocation9] sm:$0xff]
      %v403 = vld [vmem:[#allocation9 + $0x8] sm:$0xff]
      %v404 = vld [vmem:[#allocation9 + $0x10] sm:$0xff]
      %v405 = vld [vmem:[#allocation9 + $0x18] sm:$0xff]
      %v406 = vld [vmem:[#allocation9 + $0x20] sm:$0xff]
      %v407 = vld [vmem:[#allocation9 + $0x28] sm:$0xff]
      %v408 = vld [vmem:[#allocation9 + $0x30] sm:$0xff]
      %v409 = vld [vmem:[#allocation9 + $0x38] sm:$0xff]
      %v410 = vld [vmem:[#allocation9 + $0x40] sm:$0xff]
      %v411 = vld [vmem:[#allocation9 + $0x48] sm:$0xff]
      %v412 = vld [vmem:[#allocation9 + $0x50] sm:$0xff]
      %v413 = vld [vmem:[#allocation9 + $0x58] sm:$0xff]
      %v414 = vld [vmem:[#allocation9 + $0x60] sm:$0xff]
      %v415 = vld [vmem:[#allocation9 + $0x68] sm:$0xff]
      %v416 = vld [vmem:[#allocation9 + $0x70] sm:$0xff]
      %v417 = vld [vmem:[#allocation9 + $0x78] sm:$0xff]
      %418 = vmatprep.subr.mxu0 0.0
      %419 = vmatpush1.msra.mxu0 %v402
      %420 = vmatprep.subr.mxu0 0.0
      %421 = vmatpush1.msra.mxu0 %v403
      %422 = vmatprep.subr.mxu0 0.0
      %423 = vmatpush1.msra.mxu0 %v404
      %424 = vmatprep.subr.mxu0 0.0
      %425 = vmatpush1.msra.mxu0 %v405
      %426 = vmatprep.subr.mxu0 0.0
      %427 = vmatpush1.msra.mxu0 %v406
      %428 = vmatprep.subr.mxu0 0.0
      %429 = vmatpush1.msra.mxu0 %v407
      %430 = vmatprep.subr.mxu0 0.0
      %431 = vmatpush1.msra.mxu0 %v408
      %432 = vmatprep.subr.mxu0 0.0
      %433 = vmatpush1.msra.mxu0 %v409
      %434 = vmatprep.subr.mxu0 0.0
      %435 = vmatpush1.msra.mxu0 %v410
      %436 = vmatprep.subr.mxu0 0.0
      %437 = vmatpush1.msra.mxu0 %v411
      %438 = vmatprep.subr.mxu0 0.0
      %439 = vmatpush1.msra.mxu0 %v412
      %440 = vmatprep.subr.mxu0 0.0
      %441 = vmatpush1.msra.mxu0 %v413
      %442 = vmatprep.subr.mxu0 0.0
      %443 = vmatpush1.msra.mxu0 %v414
      %444 = vmatprep.subr.mxu0 0.0
      %445 = vmatpush1.msra.mxu0 %v415
      %446 = vmatprep.subr.mxu0 0.0
      %447 = vmatpush1.msra.mxu0 %v416
      %448 = vmatprep.subr.mxu0 0.0
      %449 = vmatpush1.msra.mxu0 %v417
      %450 = vmatprep.subr.mxu0 0.0
      %451 = vmatpush1.msra.mxu0 0.0
      %452 = vmatprep.subr.mxu0 0.0
      %453 = vmatpush1.msra.mxu0 0.0
      %454 = vmatprep.subr.mxu0 0.0
      %455 = vmatpush1.msra.mxu0 0.0
      %456 = vmatprep.subr.mxu0 0.0
      %457 = vmatpush1.msra.mxu0 0.0
      %458 = vmatprep.subr.mxu0 0.0
      %459 = vmatpush1.msra.mxu0 0.0
      %460 = vmatprep.subr.mxu0 0.0
      %461 = vmatpush1.msra.mxu0 0.0
      %462 = vmatprep.subr.mxu0 0.0
      %463 = vmatpush1.msra.mxu0 0.0
      %464 = vmatprep.subr.mxu0 0.0
      %465 = vmatpush1.msra.mxu0 0.0
      %466 = vmatprep.subr.mxu0 0.0
      %467 = vmatpush1.msra.mxu0 0.0
      %468 = vmatprep.subr.mxu0 0.0
      %469 = vmatpush1.msra.mxu0 0.0
      %470 = vmatprep.subr.mxu0 0.0
      %471 = vmatpush1.msra.mxu0 0.0
      %472 = vmatprep.subr.mxu0 0.0
      %473 = vmatpush1.msra.mxu0 0.0
      %474 = vmatprep.subr.mxu0 0.0
      %475 = vmatpush1.msra.mxu0 0.0
      %476 = vmatprep.subr.mxu0 0.0
      %477 = vmatpush1.msra.mxu0 0.0
      %478 = vmatprep.subr.mxu0 0.0
      %479 = vmatpush1.msra.mxu0 0.0
      %480 = vmatprep.subr.mxu0 0.0
      %481 = vmatpush1.msra.mxu0 0.0
      %482 = vmatprep.mubr.f32.mxu0 0.0
      %483 = vmatmul.mubr.f32.gmra.mrb[0].mxu0 %v401
      %v484 = vpop.f32.mrb[0].mxu0
      %v485 = vadd.f32 0.0, %v484
      %v486 = vpop.f32.mrb[0].mxu0
      %487 = vdwg.mxu0
      %v488 = vsel %vm358, %v485, 0.0
      %v489 = vrot.slane %v488, 4
      %v490 = vadd.f32 %v488, %v489
      %v491 = vrot.slane %v490, 2
      %v492 = vadd.f32 %v490, %v491
      %v493 = vrot.slane %v492, 1
      %v494 = vadd.f32 %v492, %v493
      %v495 = vmul.f32 %v494, %v366
      %v496 = vsub.f32 %v485, %v495
      %v497 = vmul.f32 %v496, %v496
      %v498 = vsel %vm358, %v497, 0.0
      %v499 = vrot.slane %v498, 4
      %v500 = vadd.f32 %v498, %v499
      %v501 = vrot.slane %v500, 2
      %v502 = vadd.f32 %v500, %v501
      %v503 = vrot.slane %v502, 1
      %v504 = vadd.f32 %v502, %v503
      %v505 = vmul.f32 %v504, %v366
      %v506 = vadd.f32 %v505, 1e-05
      %v507 = vrsqrt.pop %v506
      %v508 = vmul.f32 %v197, %v507
      %v509 = vlaneseq
      %v510 = vshrl.u32 %v509, 7
      %v511 = vsub.s32 7, %v510
      %v512 = vrot.slane %v508, %v511
      %v513 = vmul.f32 %v485, %v512
      %v514 = vmul.f32 %v495, %v508
      %v516 = vrot.slane %v514, 7
      %v518 = vsub.f32 %v198, %v516
      %v519 = vlaneseq
      %v520 = vshrl.u32 %v519, 7
      %v521 = vsub.s32 0, %v520
      %v522 = vrot.slane %v518, %v521
      %v523 = vadd.f32 %v513, %v522
      %vm524 = vcmp.gt.f32.partialorder %v523, 0.0
      %v525 = vmin.f32 %v523, 0.0
      %v526 = vmul.f32 %v525, 1.442695
      %v527 = vpow.pop %v526
      %v528 = vsub.f32 %v527, 1.0
      %v529 = vsel %vm524, %v523, %v528
      %v530 = vld [vmem:[#allocation11] sm:$0xff]
      %v531 = vld [vmem:[#allocation11 + $0x8] sm:$0xff]
      %v532 = vld [vmem:[#allocation11 + $0x10] sm:$0xff]
      %v533 = vld [vmem:[#allocation11 + $0x18] sm:$0xff]
      %v534 = vld [vmem:[#allocation11 + $0x20] sm:$0xff]
      %v535 = vld [vmem:[#allocation11 + $0x28] sm:$0xff]
      %v536 = vld [vmem:[#allocation11 + $0x30] sm:$0xff]
      %v537 = vld [vmem:[#allocation11 + $0x38] sm:$0xff]
      %v538 = vld [vmem:[#allocation11 + $0x40] sm:$0xff]
      %v539 = vld [vmem:[#allocation11 + $0x48] sm:$0xff]
      %v540 = vld [vmem:[#allocation11 + $0x50] sm:$0xff]
      %v541 = vld [vmem:[#allocation11 + $0x58] sm:$0xff]
      %v542 = vld [vmem:[#allocation11 + $0x60] sm:$0xff]
      %v543 = vld [vmem:[#allocation11 + $0x68] sm:$0xff]
      %v544 = vld [vmem:[#allocation11 + $0x70] sm:$0xff]
      %v545 = vld [vmem:[#allocation11 + $0x78] sm:$0xff]
      %v546 = vld [vmem:[%s6] sm:$0x1]
      %v548 = vlaneseq
      %v549 = vshrl.u32 %v548, 7
      %v550 = vsub.s32 0, %v549
      %v551 = vrot.slane %v546, %v550
      %553 = vmatprep.subr.mxu0 0.0
      %554 = vmatpush1.msra.mxu0 %v530
      %555 = vmatprep.subr.mxu0 0.0
      %556 = vmatpush1.msra.mxu0 %v531
      %557 = vmatprep.subr.mxu0 0.0
      %558 = vmatpush1.msra.mxu0 %v532
      %559 = vmatprep.subr.mxu0 0.0
      %560 = vmatpush1.msra.mxu0 %v533
      %561 = vmatprep.subr.mxu0 0.0
      %562 = vmatpush1.msra.mxu0 %v534
      %563 = vmatprep.subr.mxu0 0.0
      %564 = vmatpush1.msra.mxu0 %v535
      %565 = vmatprep.subr.mxu0 0.0
      %566 = vmatpush1.msra.mxu0 %v536
      %567 = vmatprep.subr.mxu0 0.0
      %568 = vmatpush1.msra.mxu0 %v537
      %569 = vmatprep.subr.mxu0 0.0
      %570 = vmatpush1.msra.mxu0 %v538
      %571 = vmatprep.subr.mxu0 0.0
      %572 = vmatpush1.msra.mxu0 %v539
      %573 = vmatprep.subr.mxu0 0.0
      %574 = vmatpush1.msra.mxu0 %v540
      %575 = vmatprep.subr.mxu0 0.0
      %576 = vmatpush1.msra.mxu0 %v541
      %577 = vmatprep.subr.mxu0 0.0
      %578 = vmatpush1.msra.mxu0 %v542
      %579 = vmatprep.subr.mxu0 0.0
      %580 = vmatpush1.msra.mxu0 %v543
      %581 = vmatprep.subr.mxu0 0.0
      %582 = vmatpush1.msra.mxu0 %v544
      %583 = vmatprep.subr.mxu0 0.0
      %584 = vmatpush1.msra.mxu0 %v545
      %585 = vmatprep.subr.mxu0 0.0
      %586 = vmatpush1.msra.mxu0 0.0
      %587 = vmatprep.subr.mxu0 0.0
      %588 = vmatpush1.msra.mxu0 0.0
      %589 = vmatprep.subr.mxu0 0.0
      %590 = vmatpush1.msra.mxu0 0.0
      %591 = vmatprep.subr.mxu0 0.0
      %592 = vmatpush1.msra.mxu0 0.0
      %593 = vmatprep.subr.mxu0 0.0
      %594 = vmatpush1.msra.mxu0 0.0
      %595 = vmatprep.subr.mxu0 0.0
      %596 = vmatpush1.msra.mxu0 0.0
      %597 = vmatprep.subr.mxu0 0.0
      %598 = vmatpush1.msra.mxu0 0.0
      %599 = vmatprep.subr.mxu0 0.0
      %600 = vmatpush1.msra.mxu0 0.0
      %601 = vmatprep.subr.mxu0 0.0
      %602 = vmatpush1.msra.mxu0 0.0
      %603 = vmatprep.subr.mxu0 0.0
      %604 = vmatpush1.msra.mxu0 0.0
      %605 = vmatprep.subr.mxu0 0.0
      %606 = vmatpush1.msra.mxu0 0.0
      %607 = vmatprep.subr.mxu0 0.0
      %608 = vmatpush1.msra.mxu0 0.0
      %609 = vmatprep.subr.mxu0 0.0
      %610 = vmatpush1.msra.mxu0 0.0
      %611 = vmatprep.subr.mxu0 0.0
      %612 = vmatpush1.msra.mxu0 0.0
      %613 = vmatprep.subr.mxu0 0.0
      %614 = vmatpush1.msra.mxu0 0.0
      %615 = vmatprep.subr.mxu0 0.0
      %616 = vmatpush1.msra.mxu0 0.0
      %617 = vmatprep.mubr.f32.mxu0 0.0
      %618 = vmatmul.mubr.f32.gmra.mrb[0].mxu0 %v529
      %v619 = vpop.f32.mrb[0].mxu0
      %v620 = vadd.f32 %v551, %v619
      %v621 = vpop.f32.mrb[0].mxu0
      %622 = vdwg.mxu0
      %623 = vst [vmem:[#allocation12] sm:$0x3] %v620
    $region53: #{tpu_custom_call.1} parent=1 // pred_fallthru
      _
    // Predicated region
    $region54: #{tpu_custom_call.1} parent=1 // pred_check
      _
    $region55: #{tpu_custom_call.1} parent=1 // pred_check_branch
      %625 = sbr.rel (0) target = $region57
    $region56: #{tpu_custom_call.1} parent=1 // pred_region
      %s627 = ssub.s32 32, 32
      %628 = vsyncadd [#allocation5], %s627
      %s630 = sshll.u32 [#allocation12], 4
      %s631 = int_to_ptr.vmem [resolvable:$true] %s630
      %633 = dma.vmem_to_hbm [thread:$0]  %s631, 32, %s7, [#allocation5]
    $region57: #{tpu_custom_call.1} parent=1 // pred_fallthru
      _
    // Predicated region
    $region58: #{tpu_custom_call.1} parent=1 // pred_check
      _
    $region59: #{tpu_custom_call.1} parent=1 // pred_check_branch
      %635 = sbr.rel (0) target = $region61
    $region60: #{tpu_custom_call.1} parent=1 // pred_region
      %636 = dma.done [#allocation5], 32
    $region61: #{tpu_custom_call.1} parent=1 // pred_fallthru
      _
    %637 = vsyncpa [#allocation4], 1
    %638 = vsyncpa [#allocation7], 1
    %639 = vsyncpa [#allocation10], 1
    %640 = vsyncpa [#allocation5], 1

</llo_original>
